<compile_context>
chip_gen: v7x
topology: tpu7x:2x2x1
jax: 0.10.0
libtpu: 0.0.40
codegen_flags: <defaults>
</compile_context>

<pallas_src>
import jax
import jax.numpy as jnp
from jax.experimental import pallas as pl
from jax.experimental.pallas import tpu as pltpu


def _round_up(x, m):
    return ((x + m - 1) // m) * m


def mlp_kernel(x_ref, w1_ref, b1_ref, w2_ref, b2_ref, o_ref):
    # x_ref:  (tm, 512)   activation tile (f32 or bf16 from the caller)
    # w1_ref: (512, 256)  first Linear weight, K-major, bf16
    # b1_ref: (1, 256)    f32
    # w2_ref: (256, 2)    second Linear weight, K-major, bf16
    # b2_ref: (1, 2)      f32
    # o_ref:  (tm, 2)     f32 logits
    x_bf16 = x_ref[...].astype(jnp.bfloat16)          # VPU cast, hidden under DMA
    h = jnp.dot(x_bf16, w1_ref[...], preferred_element_type=jnp.float32)
    h = jnp.maximum(h + b1_ref[...], 0.0)
    y = jnp.dot(h.astype(jnp.bfloat16), w2_ref[...],
                preferred_element_type=jnp.float32)
    o_ref[...] = (y + b2_ref[...]).astype(o_ref.dtype)


@jax.jit
def domain_classifier_forward(x, w1, b1, w2, b2):
    """Forward pass of DomainClassifier.

    x:  (M, 512) features (f32 or bf16)
    w1: (256, 512), b1: (256,)   -- nn.Linear(512, 256) layout
    w2: (2, 256),   b2: (2,)     -- nn.Linear(256, 2) layout
    returns (M, 2) f32 logits.
    """
    M, K = x.shape
    H = w1.shape[0]   # 256
    C = w2.shape[0]   # 2

    # Row tile: big enough that DMA dominates per-step overhead; for small
    # batches just round up to the sublane multiple of 8 (single grid step).
    TM_MAX = 2048
    tm = min(TM_MAX, _round_up(M, 8))
    grid_m = pl.cdiv(M, tm)   # ragged last block handled by masked reads/writes

    # One-time tiny weight transposes to (K, N) matmul layout, in bf16.
    w1_t = w1.T.astype(jnp.bfloat16)          # (512, 256)
    w2_t = w2.T.astype(jnp.bfloat16)          # (256, 2)
    b1_2 = b1.reshape(1, H).astype(jnp.float32)
    b2_2 = b2.reshape(1, C).astype(jnp.float32)

    cost = pl.CostEstimate(
        flops=2 * M * K * H + 2 * M * H * C,
        transcendentals=0,
        bytes_accessed=(M * K * x.dtype.itemsize      # activation read (dominant)
                        + K * H * 2 + H * C * 2       # bf16 weights
                        + (H + C) * 4                 # biases
                        + M * C * 4),                 # logits written
    )

    out = pl.pallas_call(
        mlp_kernel,
        out_shape=jax.ShapeDtypeStruct((M, C), jnp.float32),
        grid=(grid_m,),
        in_specs=[
            pl.BlockSpec((tm, K), lambda i: (i, 0)),   # activation tile (pipelined)
            pl.BlockSpec((K, H), lambda i: (0, 0)),    # W1 resident in VMEM
            pl.BlockSpec((1, H), lambda i: (0, 0)),    # b1 resident
            pl.BlockSpec((H, C), lambda i: (0, 0)),    # W2 resident
            pl.BlockSpec((1, C), lambda i: (0, 0)),    # b2 resident
        ],
        out_specs=pl.BlockSpec((tm, C), lambda i: (i, 0)),
        compiler_params=pltpu.CompilerParams(
            dimension_semantics=("parallel",),         # rows independent
            vmem_limit_bytes=32 * 1024 * 1024,         # cover 4 MiB x2 buffers + temps
        ),
        cost_estimate=cost,
    )(x, w1_t, b1_2, w2_t, b2_2)

    return out


def _reference_forward(x, w1, b1, w2, b2):
    """Pure-JAX f32 reference mirroring DomainClassifier.forward."""
    h = jnp.maximum(x @ w1.T + b1, 0.0)
    return h @ w2.T + b2


if __name__ == "__main__":
    key = jax.random.PRNGKey(0)
    k_x, k_w1, k_b1, k_w2, k_b2 = jax.random.split(key, 5)

    B, D_IN, D_HID, D_OUT = 2, 512, 256, 2

    x = jax.random.normal(k_x, (B, D_IN), dtype=jnp.float32)

    # Deterministic parameter init (shapes per nn.Linear).
    w1 = 0.05 * jax.random.normal(k_w1, (D_HID, D_IN), dtype=jnp.float32)
    b1 = 0.05 * jax.random.normal(k_b1, (D_HID,), dtype=jnp.float32)
    w2 = 0.05 * jax.random.normal(k_w2, (D_OUT, D_HID), dtype=jnp.float32)
    b2 = 0.05 * jax.random.normal(k_b2, (D_OUT,), dtype=jnp.float32)

    out = domain_classifier_forward(x, w1, b1, w2, b2)
    out = jax.block_until_ready(out)

    ref = _reference_forward(x, w1, b1, w2, b2)
    assert out.shape == (B, D_OUT)
    # bf16 inputs / f32 accumulation over K=512 -> relaxed tolerance vs f32 ref.
    assert jnp.allclose(out, ref, atol=5e-2, rtol=5e-2)

    print("KERNEL_OK")
</pallas_src>

<mosaic_0001>
module attributes {stable_mosaic.version = 11 : i64} {
  func.func @mlp_kernel(%arg0: i32, %arg1: memref<8x512xf32, #tpu.memory_space<vmem>>, %arg2: memref<512x256xbf16, #tpu.memory_space<vmem>>, %arg3: memref<1x256xf32, #tpu.memory_space<vmem>>, %arg4: memref<256x2xbf16, #tpu.memory_space<vmem>>, %arg5: memref<1x2xf32, #tpu.memory_space<vmem>>, %arg6: memref<8x2xf32, #tpu.memory_space<vmem>>) attributes {dimension_semantics = [#tpu.dimension_semantics<parallel>], iteration_bounds = array<i64: 1>, scalar_prefetch = 0 : i64, scratch_operands = 0 : i64, tpu.core_type = #tpu.core_type<tc>, window_params = [{transform_indices = @transform_0, window_bounds = array<i64: 8, 512>}, {pipeline_mode = #tpu.pipeline_mode<synchronous>, transform_indices = @transform_1, window_bounds = array<i64: 512, 256>}, {pipeline_mode = #tpu.pipeline_mode<synchronous>, transform_indices = @transform_2, window_bounds = array<i64: 1, 256>}, {pipeline_mode = #tpu.pipeline_mode<synchronous>, transform_indices = @transform_3, window_bounds = array<i64: 256, 2>}, {pipeline_mode = #tpu.pipeline_mode<synchronous>, transform_indices = @transform_4, window_bounds = array<i64: 1, 2>}, {transform_indices = @transform_5, window_bounds = array<i64: 8, 2>}]} {
    %c0 = arith.constant 0 : index
    %c0_0 = arith.constant 0 : index
    %0 = vector.load %arg1[%c0, %c0_0] : memref<8x512xf32, #tpu.memory_space<vmem>>, vector<8x512xf32>
    %1 = arith.truncf %0 : vector<8x512xf32> to vector<8x512xbf16>
    %c0_1 = arith.constant 0 : index
    %c0_2 = arith.constant 0 : index
    %2 = vector.load %arg2[%c0_1, %c0_2] : memref<512x256xbf16, #tpu.memory_space<vmem>>, vector<512x256xbf16>
    %cst = arith.constant dense<0.000000e+00> : vector<8x256xf32>
    %3 = tpu.matmul %1, %2, %cst {dimension_numbers = #tpu.dot_dimension_numbers<[1], [0], [0], [1], [0, 0, 1, 1], [], []>} : vector<8x512xbf16>, vector<512x256xbf16>, vector<8x256xf32> -> vector<8x256xf32>
    %c0_3 = arith.constant 0 : index
    %c0_4 = arith.constant 0 : index
    %4 = vector.load %arg3[%c0_3, %c0_4] : memref<1x256xf32, #tpu.memory_space<vmem>>, vector<1x256xf32>
    %5 = vector.broadcast %4 : vector<1x256xf32> to vector<8x256xf32>
    %6 = arith.addf %3, %5 : vector<8x256xf32>
    %cst_5 = arith.constant 0.000000e+00 : f32
    %7 = vector.broadcast %cst_5 : f32 to vector<8x256xf32>
    %8 = arith.maximumf %6, %7 : vector<8x256xf32>
    %9 = arith.truncf %8 : vector<8x256xf32> to vector<8x256xbf16>
    %c0_6 = arith.constant 0 : index
    %c0_7 = arith.constant 0 : index
    %10 = vector.load %arg4[%c0_6, %c0_7] : memref<256x2xbf16, #tpu.memory_space<vmem>>, vector<256x2xbf16>
    %cst_8 = arith.constant dense<0.000000e+00> : vector<8x2xf32>
    %11 = tpu.matmul %9, %10, %cst_8 {dimension_numbers = #tpu.dot_dimension_numbers<[1], [0], [0], [1], [0, 0, 1, 1], [], []>} : vector<8x256xbf16>, vector<256x2xbf16>, vector<8x2xf32> -> vector<8x2xf32>
    %c0_9 = arith.constant 0 : index
    %c0_10 = arith.constant 0 : index
    %12 = vector.load %arg5[%c0_9, %c0_10] : memref<1x2xf32, #tpu.memory_space<vmem>>, vector<1x2xf32>
    %13 = vector.broadcast %12 : vector<1x2xf32> to vector<8x2xf32>
    %14 = arith.addf %11, %13 : vector<8x2xf32>
    %c0_11 = arith.constant 0 : index
    %c0_12 = arith.constant 0 : index
    %15 = vector.load %arg6[%c0_11, %c0_12] : memref<8x2xf32, #tpu.memory_space<vmem>>, vector<8x2xf32>
    tpu.vector_store %arg6[%c0_11, %c0_12], %14 {strides = array<i32>} : memref<8x2xf32, #tpu.memory_space<vmem>>, vector<8x2xf32>,
    return
  }
  func.func @transform_0(%arg0: i32) -> (i32, i32) {
    %c0_i32 = arith.constant 0 : i32
    %c0_i32_0 = arith.constant 0 : i32
    return %arg0, %c0_i32 : i32, i32
  }
  func.func @transform_1(%arg0: i32) -> (i32, i32) {
    %c0_i32 = arith.constant 0 : i32
    %c0_i32_0 = arith.constant 0 : i32
    %c0_i32_1 = arith.constant 0 : i32
    return %c0_i32, %c0_i32_0 : i32, i32
  }
  func.func @transform_2(%arg0: i32) -> (i32, i32) {
    %c0_i32 = arith.constant 0 : i32
    %c0_i32_0 = arith.constant 0 : i32
    %c0_i32_1 = arith.constant 0 : i32
    return %c0_i32, %c0_i32_0 : i32, i32
  }
  func.func @transform_3(%arg0: i32) -> (i32, i32) {
    %c0_i32 = arith.constant 0 : i32
    %c0_i32_0 = arith.constant 0 : i32
    %c0_i32_1 = arith.constant 0 : i32
    return %c0_i32, %c0_i32_0 : i32, i32
  }
  func.func @transform_4(%arg0: i32) -> (i32, i32) {
    %c0_i32 = arith.constant 0 : i32
    %c0_i32_0 = arith.constant 0 : i32
    %c0_i32_1 = arith.constant 0 : i32
    return %c0_i32, %c0_i32_0 : i32, i32
  }
  func.func @transform_5(%arg0: i32) -> (i32, i32) {
    %c0_i32 = arith.constant 0 : i32
    %c0_i32_0 = arith.constant 0 : i32
    return %arg0, %c0_i32 : i32, i32
  }
}

</mosaic_0001>

<llo_original>
// kernel: domain_classifier_forward.1
$region0: #{domain_classifier_forward.1}
  #allocation0 [shape = 'u32[]', space=smem, size = 0x4, offset = 0x4, fixed_abs, tag = 'smem constant byte address 0x4 - core index']
  #allocation1 [shape = 'u32[144,128]{1,0:T(1,128)}', space=vmem, size = 0x12000, scoped, tag = 'internal scratch']
  %s0 = inlined_call_operand.vmem [shape: f32[2,512], index: 0, kind: input, shape index: {}]
  %s1 = inlined_call_operand.vmem [shape: bf16[512,256], index: 1, kind: input, shape index: {}]
  %s2 = inlined_call_operand.vmem [shape: f32[1,256], index: 2, kind: input, shape index: {}]
  %s3 = inlined_call_operand.vmem [shape: bf16[256,2], index: 3, kind: input, shape index: {}]
  %s4 = inlined_call_operand.vmem [shape: f32[1,2], index: 4, kind: input, shape index: {}]
  %s5 = inlined_call_operand.hbm [shape: f32[2,2], index: 5, kind: output, shape index: {}]
  %s6 = sld [smem:[#allocation0]]
  $region30: #{domain_classifier_forward.1} parent=0
    _
  %s8 = ssub.s32 1, %s6
  %s9 = scalar_select 0, %s8, %s6
  $region1: #{domain_classifier_forward.1} parent=0
    #allocation2 [shape = 'u8[4096]{0}', space=vmem, size = 0x1000, scoped, tag = 'output window, operand 0, single buffered']
    #allocation3 [shape = 's32[1]{0}', space=sflag, size = 0x4, scoped, tag = 'scoped memory for domain_classifier_forward.1']
    %10 = vsyncpa [#allocation3], 0
    // Predicated region
    $region2: #{domain_classifier_forward.1} parent=1 // pred_check
      _
    $region3: #{domain_classifier_forward.1} parent=1 // pred_check_branch
      %12 = sbr.rel (0) target = $region5
    $region4: #{domain_classifier_forward.1} parent=1 // pred_region
      _
    $region5: #{domain_classifier_forward.1} parent=1 // pred_fallthru
      _
    // Predicated region
    $region6: #{domain_classifier_forward.1} parent=1 // pred_check
      _
    $region7: #{domain_classifier_forward.1} parent=1 // pred_check_branch
      %14 = sbr.rel (0) target = $region9
    $region8: #{domain_classifier_forward.1} parent=1 // pred_region
      _
    $region9: #{domain_classifier_forward.1} parent=1 // pred_fallthru
      _
    // Predicated region
    $region10: #{domain_classifier_forward.1} parent=1 // pred_check
      _
    $region11: #{domain_classifier_forward.1} parent=1 // pred_check_branch
      %16 = sbr.rel (0) target = $region13
    $region12: #{domain_classifier_forward.1} parent=1 // pred_region
      _
    $region13: #{domain_classifier_forward.1} parent=1 // pred_fallthru
      _
    // Predicated region
    $region14: #{domain_classifier_forward.1} parent=1 // pred_check
      _
    $region15: #{domain_classifier_forward.1} parent=1 // pred_check_branch
      %18 = sbr.rel (0) target = $region17
    $region16: #{domain_classifier_forward.1} parent=1 // pred_region
      _
    $region17: #{domain_classifier_forward.1} parent=1 // pred_fallthru
      _
    // Predicated region
    $region18: #{domain_classifier_forward.1} parent=1 // pred_check
      _
    $region19: #{domain_classifier_forward.1} parent=1 // pred_check_branch
      %20 = sbr.rel (0) target = $region21
    $region20: #{domain_classifier_forward.1} parent=1 // pred_region
      _
    $region21: #{domain_classifier_forward.1} parent=1 // pred_fallthru
      _
    %v22 = vld [vmem:[%s0] sm:$0xff]
    %v23 = vld [vmem:[%s0 + $0x8] sm:$0xff]
    %v24 = vld [vmem:[%s0 + $0x10] sm:$0xff]
    %v25 = vld [vmem:[%s0 + $0x18] sm:$0xff]
    %v30 = vcombine.low %v22, %v23
    %v31 = vcombine.high %v22, %v23
    %v32 = vcombine.low %v24, %v25
    %v33 = vcombine.high %v24, %v25
    %v35 = vunpack.c.l.s4 1983009808
    %v36 = vunpack.c.0.s8 %v35
    %v37 = vlaneseq
    %v38 = vshrl.u32 %v37, 7
    %v39 = vsub.s32 %v36, %v38
    %v40 = vrot.slane %v30, %v39
    %v42 = vunpack.c.l.s4 1983009808
    %v43 = vunpack.c.0.s8 %v42
    %v44 = vlaneseq
    %v45 = vshrl.u32 %v44, 7
    %v46 = vsub.s32 %v43, %v45
    %v47 = vrot.slane %v31, %v46
    %v49 = vunpack.c.l.s4 1983009808
    %v50 = vunpack.c.0.s8 %v49
    %v51 = vlaneseq
    %v52 = vshrl.u32 %v51, 7
    %v53 = vsub.s32 %v50, %v52
    %v54 = vrot.slane %v32, %v53
    %v56 = vunpack.c.l.s4 1983009808
    %v57 = vunpack.c.0.s8 %v56
    %v58 = vlaneseq
    %v59 = vshrl.u32 %v58, 7
    %v60 = vsub.s32 %v57, %v59
    %v61 = vrot.slane %v33, %v60
    %v62 = vcombine.low %v40, %v54
    %v63 = vcombine.high %v40, %v54
    %v64 = vcombine.low %v47, %v61
    %v65 = vcombine.high %v47, %v61
    %v70 = vpack.c.bf16 %v62, %v62
    %v71 = vpack.c.bf16 %v63, %v63
    %v72 = vpack.c.bf16 %v64, %v64
    %v73 = vpack.c.bf16 %v65, %v65
    %v74 = vld [vmem:[%s1] sm:$0xff]
    %v75 = vld [vmem:[%s1 + $0x8] sm:$0xff]
    %v76 = vld [vmem:[%s1 + $0x10] sm:$0xff]
    %v77 = vld [vmem:[%s1 + $0x18] sm:$0xff]
    %v78 = vld [vmem:[%s1 + $0x20] sm:$0xff]
    %v79 = vld [vmem:[%s1 + $0x28] sm:$0xff]
    %v80 = vld [vmem:[%s1 + $0x30] sm:$0xff]
    %v81 = vld [vmem:[%s1 + $0x38] sm:$0xff]
    %v82 = vld [vmem:[%s1 + $0x40] sm:$0xff]
    %v83 = vld [vmem:[%s1 + $0x48] sm:$0xff]
    %v84 = vld [vmem:[%s1 + $0x50] sm:$0xff]
    %v85 = vld [vmem:[%s1 + $0x58] sm:$0xff]
    %v86 = vld [vmem:[%s1 + $0x60] sm:$0xff]
    %v87 = vld [vmem:[%s1 + $0x68] sm:$0xff]
    %v88 = vld [vmem:[%s1 + $0x70] sm:$0xff]
    %v89 = vld [vmem:[%s1 + $0x78] sm:$0xff]
    %v90 = vld [vmem:[%s1 + $0x80] sm:$0xff]
    %v91 = vld [vmem:[%s1 + $0x88] sm:$0xff]
    %v92 = vld [vmem:[%s1 + $0x90] sm:$0xff]
    %v93 = vld [vmem:[%s1 + $0x98] sm:$0xff]
    %v94 = vld [vmem:[%s1 + $0xa0] sm:$0xff]
    %v95 = vld [vmem:[%s1 + $0xa8] sm:$0xff]
    %v96 = vld [vmem:[%s1 + $0xb0] sm:$0xff]
    %v97 = vld [vmem:[%s1 + $0xb8] sm:$0xff]
    %v98 = vld [vmem:[%s1 + $0xc0] sm:$0xff]
    %v99 = vld [vmem:[%s1 + $0xc8] sm:$0xff]
    %v100 = vld [vmem:[%s1 + $0xd0] sm:$0xff]
    %v101 = vld [vmem:[%s1 + $0xd8] sm:$0xff]
    %v102 = vld [vmem:[%s1 + $0xe0] sm:$0xff]
    %v103 = vld [vmem:[%s1 + $0xe8] sm:$0xff]
    %v104 = vld [vmem:[%s1 + $0xf0] sm:$0xff]
    %v105 = vld [vmem:[%s1 + $0xf8] sm:$0xff]
    %v106 = vld [vmem:[%s1 + $0x100] sm:$0xff]
    %v107 = vld [vmem:[%s1 + $0x108] sm:$0xff]
    %v108 = vld [vmem:[%s1 + $0x110] sm:$0xff]
    %v109 = vld [vmem:[%s1 + $0x118] sm:$0xff]
    %v110 = vld [vmem:[%s1 + $0x120] sm:$0xff]
    %v111 = vld [vmem:[%s1 + $0x128] sm:$0xff]
    %v112 = vld [vmem:[%s1 + $0x130] sm:$0xff]
    %v113 = vld [vmem:[%s1 + $0x138] sm:$0xff]
    %v114 = vld [vmem:[%s1 + $0x140] sm:$0xff]
    %v115 = vld [vmem:[%s1 + $0x148] sm:$0xff]
    %v116 = vld [vmem:[%s1 + $0x150] sm:$0xff]
    %v117 = vld [vmem:[%s1 + $0x158] sm:$0xff]
    %v118 = vld [vmem:[%s1 + $0x160] sm:$0xff]
    %v119 = vld [vmem:[%s1 + $0x168] sm:$0xff]
    %v120 = vld [vmem:[%s1 + $0x170] sm:$0xff]
    %v121 = vld [vmem:[%s1 + $0x178] sm:$0xff]
    %v122 = vld [vmem:[%s1 + $0x180] sm:$0xff]
    %v123 = vld [vmem:[%s1 + $0x188] sm:$0xff]
    %v124 = vld [vmem:[%s1 + $0x190] sm:$0xff]
    %v125 = vld [vmem:[%s1 + $0x198] sm:$0xff]
    %v126 = vld [vmem:[%s1 + $0x1a0] sm:$0xff]
    %v127 = vld [vmem:[%s1 + $0x1a8] sm:$0xff]
    %v128 = vld [vmem:[%s1 + $0x1b0] sm:$0xff]
    %v129 = vld [vmem:[%s1 + $0x1b8] sm:$0xff]
    %v130 = vld [vmem:[%s1 + $0x1c0] sm:$0xff]
    %v131 = vld [vmem:[%s1 + $0x1c8] sm:$0xff]
    %v132 = vld [vmem:[%s1 + $0x1d0] sm:$0xff]
    %v133 = vld [vmem:[%s1 + $0x1d8] sm:$0xff]
    %v134 = vld [vmem:[%s1 + $0x1e0] sm:$0xff]
    %v135 = vld [vmem:[%s1 + $0x1e8] sm:$0xff]
    %v136 = vld [vmem:[%s1 + $0x1f0] sm:$0xff]
    %v137 = vld [vmem:[%s1 + $0x1f8] sm:$0xff]
    %v138 = vld [vmem:[%s2] sm:$0x3]
    %v140 = vlaneseq
    %v141 = vshrl.u32 %v140, 7
    %v142 = vsub.s32 0, %v141
    %v143 = vrot.slane %v138, %v142
    %v144 = vlaneseq
    %v145 = vshrl.u32 %v144, 7
    %v146 = vsub.s32 1, %v145
    %v147 = vrot.slane %v138, %v146
    %v214 = vunpack.c.l.b16 %v74
    %v215 = vunpack.c.h.b16 %v74
    %v216 = vunpack.c.l.b16 %v75
    %v217 = vunpack.c.h.b16 %v75
    %v218 = vunpack.c.l.b16 %v76
    %v219 = vunpack.c.h.b16 %v76
    %v220 = vunpack.c.l.b16 %v77
    %v221 = vunpack.c.h.b16 %v77
    %v222 = vunpack.c.l.b16 %v78
    %v223 = vunpack.c.h.b16 %v78
    %v224 = vunpack.c.l.b16 %v79
    %v225 = vunpack.c.h.b16 %v79
    %v226 = vunpack.c.l.b16 %v80
    %v227 = vunpack.c.h.b16 %v80
    %v228 = vunpack.c.l.b16 %v81
    %v229 = vunpack.c.h.b16 %v81
    %v230 = vunpack.c.l.b16 %v82
    %v231 = vunpack.c.h.b16 %v82
    %v232 = vunpack.c.l.b16 %v83
    %v233 = vunpack.c.h.b16 %v83
    %v234 = vunpack.c.l.b16 %v84
    %v235 = vunpack.c.h.b16 %v84
    %v236 = vunpack.c.l.b16 %v85
    %v237 = vunpack.c.h.b16 %v85
    %v238 = vunpack.c.l.b16 %v86
    %v239 = vunpack.c.h.b16 %v86
    %v240 = vunpack.c.l.b16 %v87
    %v241 = vunpack.c.h.b16 %v87
    %v242 = vunpack.c.l.b16 %v88
    %v243 = vunpack.c.h.b16 %v88
    %v244 = vunpack.c.l.b16 %v89
    %v245 = vunpack.c.h.b16 %v89
    %v246 = vunpack.c.l.b16 %v90
    %v247 = vunpack.c.h.b16 %v90
    %v248 = vunpack.c.l.b16 %v91
    %v249 = vunpack.c.h.b16 %v91
    %v250 = vunpack.c.l.b16 %v92
    %v251 = vunpack.c.h.b16 %v92
    %v252 = vunpack.c.l.b16 %v93
    %v253 = vunpack.c.h.b16 %v93
    %v254 = vunpack.c.l.b16 %v94
    %v255 = vunpack.c.h.b16 %v94
    %v256 = vunpack.c.l.b16 %v95
    %v257 = vunpack.c.h.b16 %v95
    %v258 = vunpack.c.l.b16 %v96
    %v259 = vunpack.c.h.b16 %v96
    %v260 = vunpack.c.l.b16 %v97
    %v261 = vunpack.c.h.b16 %v97
    %v262 = vunpack.c.l.b16 %v98
    %v263 = vunpack.c.h.b16 %v98
    %v264 = vunpack.c.l.b16 %v99
    %v265 = vunpack.c.h.b16 %v99
    %v266 = vunpack.c.l.b16 %v100
    %v267 = vunpack.c.h.b16 %v100
    %v268 = vunpack.c.l.b16 %v101
    %v269 = vunpack.c.h.b16 %v101
    %v270 = vunpack.c.l.b16 %v102
    %v271 = vunpack.c.h.b16 %v102
    %v272 = vunpack.c.l.b16 %v103
    %v273 = vunpack.c.h.b16 %v103
    %v274 = vunpack.c.l.b16 %v104
    %v275 = vunpack.c.h.b16 %v104
    %v276 = vunpack.c.l.b16 %v105
    %v277 = vunpack.c.h.b16 %v105
    %v278 = vunpack.c.l.b16 %v106
    %v279 = vunpack.c.h.b16 %v106
    %v280 = vunpack.c.l.b16 %v107
    %v281 = vunpack.c.h.b16 %v107
    %v282 = vunpack.c.l.b16 %v108
    %v283 = vunpack.c.h.b16 %v108
    %v284 = vunpack.c.l.b16 %v109
    %v285 = vunpack.c.h.b16 %v109
    %v286 = vunpack.c.l.b16 %v110
    %v287 = vunpack.c.h.b16 %v110
    %v288 = vunpack.c.l.b16 %v111
    %v289 = vunpack.c.h.b16 %v111
    %v290 = vunpack.c.l.b16 %v112
    %v291 = vunpack.c.h.b16 %v112
    %v292 = vunpack.c.l.b16 %v113
    %v293 = vunpack.c.h.b16 %v113
    %v294 = vunpack.c.l.b16 %v114
    %v295 = vunpack.c.h.b16 %v114
    %v296 = vunpack.c.l.b16 %v115
    %v297 = vunpack.c.h.b16 %v115
    %v298 = vunpack.c.l.b16 %v116
    %v299 = vunpack.c.h.b16 %v116
    %v300 = vunpack.c.l.b16 %v117
    %v301 = vunpack.c.h.b16 %v117
    %v302 = vunpack.c.l.b16 %v118
    %v303 = vunpack.c.h.b16 %v118
    %v304 = vunpack.c.l.b16 %v119
    %v305 = vunpack.c.h.b16 %v119
    %v306 = vunpack.c.l.b16 %v120
    %v307 = vunpack.c.h.b16 %v120
    %v308 = vunpack.c.l.b16 %v121
    %v309 = vunpack.c.h.b16 %v121
    %v310 = vunpack.c.l.b16 %v122
    %v311 = vunpack.c.h.b16 %v122
    %v312 = vunpack.c.l.b16 %v123
    %v313 = vunpack.c.h.b16 %v123
    %v314 = vunpack.c.l.b16 %v124
    %v315 = vunpack.c.h.b16 %v124
    %v316 = vunpack.c.l.b16 %v125
    %v317 = vunpack.c.h.b16 %v125
    %v318 = vunpack.c.l.b16 %v126
    %v319 = vunpack.c.h.b16 %v126
    %v320 = vunpack.c.l.b16 %v127
    %v321 = vunpack.c.h.b16 %v127
    %v322 = vunpack.c.l.b16 %v128
    %v323 = vunpack.c.h.b16 %v128
    %v324 = vunpack.c.l.b16 %v129
    %v325 = vunpack.c.h.b16 %v129
    %v326 = vunpack.c.l.b16 %v130
    %v327 = vunpack.c.h.b16 %v130
    %v328 = vunpack.c.l.b16 %v131
    %v329 = vunpack.c.h.b16 %v131
    %v330 = vunpack.c.l.b16 %v132
    %v331 = vunpack.c.h.b16 %v132
    %v332 = vunpack.c.l.b16 %v133
    %v333 = vunpack.c.h.b16 %v133
    %v334 = vunpack.c.l.b16 %v134
    %v335 = vunpack.c.h.b16 %v134
    %v336 = vunpack.c.l.b16 %v135
    %v337 = vunpack.c.h.b16 %v135
    %v338 = vunpack.c.l.b16 %v136
    %v339 = vunpack.c.h.b16 %v136
    %v340 = vunpack.c.l.b16 %v137
    %v341 = vunpack.c.h.b16 %v137
    %v342 = vpack.c.b16 %v216, %v214
    %v343 = vpack.c.b16 %v217, %v215
    %v344 = vpack.c.b16 %v220, %v218
    %v345 = vpack.c.b16 %v221, %v219
    %v346 = vpack.c.b16 %v224, %v222
    %v347 = vpack.c.b16 %v225, %v223
    %v348 = vpack.c.b16 %v228, %v226
    %v349 = vpack.c.b16 %v229, %v227
    %v350 = vpack.c.b16 %v232, %v230
    %v351 = vpack.c.b16 %v233, %v231
    %v352 = vpack.c.b16 %v236, %v234
    %v353 = vpack.c.b16 %v237, %v235
    %v354 = vpack.c.b16 %v240, %v238
    %v355 = vpack.c.b16 %v241, %v239
    %v356 = vpack.c.b16 %v244, %v242
    %v357 = vpack.c.b16 %v245, %v243
    %v358 = vpack.c.b16 %v248, %v246
    %v359 = vpack.c.b16 %v249, %v247
    %v360 = vpack.c.b16 %v252, %v250
    %v361 = vpack.c.b16 %v253, %v251
    %v362 = vpack.c.b16 %v256, %v254
    %v363 = vpack.c.b16 %v257, %v255
    %v364 = vpack.c.b16 %v260, %v258
    %v365 = vpack.c.b16 %v261, %v259
    %v366 = vpack.c.b16 %v264, %v262
    %v367 = vpack.c.b16 %v265, %v263
    %v368 = vpack.c.b16 %v268, %v266
    %v369 = vpack.c.b16 %v269, %v267
    %v370 = vpack.c.b16 %v272, %v270
    %v371 = vpack.c.b16 %v273, %v271
    %v372 = vpack.c.b16 %v276, %v274
    %v373 = vpack.c.b16 %v277, %v275
    %v374 = vpack.c.b16 %v280, %v278
    %v375 = vpack.c.b16 %v281, %v279
    %v376 = vpack.c.b16 %v284, %v282
    %v377 = vpack.c.b16 %v285, %v283
    %v378 = vpack.c.b16 %v288, %v286
    %v379 = vpack.c.b16 %v289, %v287
    %v380 = vpack.c.b16 %v292, %v290
    %v381 = vpack.c.b16 %v293, %v291
    %v382 = vpack.c.b16 %v296, %v294
    %v383 = vpack.c.b16 %v297, %v295
    %v384 = vpack.c.b16 %v300, %v298
    %v385 = vpack.c.b16 %v301, %v299
    %v386 = vpack.c.b16 %v304, %v302
    %v387 = vpack.c.b16 %v305, %v303
    %v388 = vpack.c.b16 %v308, %v306
    %v389 = vpack.c.b16 %v309, %v307
    %v390 = vpack.c.b16 %v312, %v310
    %v391 = vpack.c.b16 %v313, %v311
    %v392 = vpack.c.b16 %v316, %v314
    %v393 = vpack.c.b16 %v317, %v315
    %v394 = vpack.c.b16 %v320, %v318
    %v395 = vpack.c.b16 %v321, %v319
    %v396 = vpack.c.b16 %v324, %v322
    %v397 = vpack.c.b16 %v325, %v323
    %v398 = vpack.c.b16 %v328, %v326
    %v399 = vpack.c.b16 %v329, %v327
    %v400 = vpack.c.b16 %v332, %v330
    %v401 = vpack.c.b16 %v333, %v331
    %v402 = vpack.c.b16 %v336, %v334
    %v403 = vpack.c.b16 %v337, %v335
    %v404 = vpack.c.b16 %v340, %v338
    %v405 = vpack.c.b16 %v341, %v339
    %470 = vmatprep.subr.bf16.mxu0 %v343
    %471 = vmatpush1.bf16.msra.mxu0 %v342
    %472 = vmatprep.subr.bf16.mxu0 %v345
    %473 = vmatpush1.bf16.msra.mxu0 %v344
    %474 = vmatprep.subr.bf16.mxu0 %v347
    %475 = vmatpush1.bf16.msra.mxu0 %v346
    %476 = vmatprep.subr.bf16.mxu0 %v349
    %477 = vmatpush1.bf16.msra.mxu0 %v348
    %478 = vmatprep.subr.bf16.mxu0 %v351
    %479 = vmatpush1.bf16.msra.mxu0 %v350
    %480 = vmatprep.subr.bf16.mxu0 %v353
    %481 = vmatpush1.bf16.msra.mxu0 %v352
    %482 = vmatprep.subr.bf16.mxu0 %v355
    %483 = vmatpush1.bf16.msra.mxu0 %v354
    %484 = vmatprep.subr.bf16.mxu0 %v357
    %485 = vmatpush1.bf16.msra.mxu0 %v356
    %486 = vmatprep.subr.bf16.mxu0 %v359
    %487 = vmatpush1.bf16.msra.mxu0 %v358
    %488 = vmatprep.subr.bf16.mxu0 %v361
    %489 = vmatpush1.bf16.msra.mxu0 %v360
    %490 = vmatprep.subr.bf16.mxu0 %v363
    %491 = vmatpush1.bf16.msra.mxu0 %v362
    %492 = vmatprep.subr.bf16.mxu0 %v365
    %493 = vmatpush1.bf16.msra.mxu0 %v364
    %494 = vmatprep.subr.bf16.mxu0 %v367
    %495 = vmatpush1.bf16.msra.mxu0 %v366
    %496 = vmatprep.subr.bf16.mxu0 %v369
    %497 = vmatpush1.bf16.msra.mxu0 %v368
    %498 = vmatprep.subr.bf16.mxu0 %v371
    %499 = vmatpush1.bf16.msra.mxu0 %v370
    %500 = vmatprep.subr.bf16.mxu0 %v373
    %501 = vmatpush1.bf16.msra.mxu0 %v372
    %502 = vmatprep.mubr.bf16.mxu0 %v71
    %503 = vmatmul.mubr.bf16.gmra.mrb[0].mxu0 %v70
    %v504 = vpop.f32.mrb[0].mxu0
    %v505 = vadd.f32 %v143, %v504
    %v506 = vpop.f32.mrb[0].mxu0
    %v507 = vadd.f32 %v147, %v506
    %v508 = vpop.f32.mrb[0].mxu0
    %v509 = vpop.f32.mrb[0].mxu0
    %510 = vdwg.mxu0
    %511 = vmatprep.subr.bf16.mxu0 %v375
    %512 = vmatpush1.bf16.msra.mxu0 %v374
    %513 = vmatprep.subr.bf16.mxu0 %v377
    %514 = vmatpush1.bf16.msra.mxu0 %v376
    %515 = vmatprep.subr.bf16.mxu0 %v379
    %516 = vmatpush1.bf16.msra.mxu0 %v378
    %517 = vmatprep.subr.bf16.mxu0 %v381
    %518 = vmatpush1.bf16.msra.mxu0 %v380
    %519 = vmatprep.subr.bf16.mxu0 %v383
    %520 = vmatpush1.bf16.msra.mxu0 %v382
    %521 = vmatprep.subr.bf16.mxu0 %v385
    %522 = vmatpush1.bf16.msra.mxu0 %v384
    %523 = vmatprep.subr.bf16.mxu0 %v387
    %524 = vmatpush1.bf16.msra.mxu0 %v386
    %525 = vmatprep.subr.bf16.mxu0 %v389
    %526 = vmatpush1.bf16.msra.mxu0 %v388
    %527 = vmatprep.subr.bf16.mxu0 %v391
    %528 = vmatpush1.bf16.msra.mxu0 %v390
    %529 = vmatprep.subr.bf16.mxu0 %v393
    %530 = vmatpush1.bf16.msra.mxu0 %v392
    %531 = vmatprep.subr.bf16.mxu0 %v395
    %532 = vmatpush1.bf16.msra.mxu0 %v394
    %533 = vmatprep.subr.bf16.mxu0 %v397
    %534 = vmatpush1.bf16.msra.mxu0 %v396
    %535 = vmatprep.subr.bf16.mxu0 %v399
    %536 = vmatpush1.bf16.msra.mxu0 %v398
    %537 = vmatprep.subr.bf16.mxu0 %v401
    %538 = vmatpush1.bf16.msra.mxu0 %v400
    %539 = vmatprep.subr.bf16.mxu0 %v403
    %540 = vmatpush1.bf16.msra.mxu0 %v402
    %541 = vmatprep.subr.bf16.mxu0 %v405
    %542 = vmatpush1.bf16.msra.mxu0 %v404
    %543 = vmatprep.mubr.bf16.mxu0 %v73
    %544 = vmatmul.mubr.bf16.gmra.mrb[0].mxu0 %v72
    %v545 = vpop.f32.mrb[0].mxu0
    %v546 = vadd.f32 %v505, %v545
    %v547 = vpop.f32.mrb[0].mxu0
    %v548 = vadd.f32 %v507, %v547
    %v549 = vpop.f32.mrb[0].mxu0
    %v550 = vpop.f32.mrb[0].mxu0
    %551 = vdwg.mxu0
    %v552 = vmax.f32 %v546, 0.0
    %v553 = vmax.f32 %v548, 0.0
    %v554 = vpack.c.bf16 %v552, %v552
    %v555 = vpack.c.bf16 %v553, %v553
    %v556 = vld [vmem:[%s3] sm:$0xf]
    %v557 = vld [vmem:[%s3 + $0x4] sm:$0xf]
    %v558 = vld [vmem:[%s3 + $0x8] sm:$0xf]
    %v559 = vld [vmem:[%s3 + $0xc] sm:$0xf]
    %v560 = vld [vmem:[%s3 + $0x10] sm:$0xf]
    %v561 = vld [vmem:[%s3 + $0x14] sm:$0xf]
    %v562 = vld [vmem:[%s3 + $0x18] sm:$0xf]
    %v563 = vld [vmem:[%s3 + $0x1c] sm:$0xf]
    %v564 = vld [vmem:[%s3 + $0x20] sm:$0xf]
    %v565 = vld [vmem:[%s3 + $0x24] sm:$0xf]
    %v566 = vld [vmem:[%s3 + $0x28] sm:$0xf]
    %v567 = vld [vmem:[%s3 + $0x2c] sm:$0xf]
    %v568 = vld [vmem:[%s3 + $0x30] sm:$0xf]
    %v569 = vld [vmem:[%s3 + $0x34] sm:$0xf]
    %v570 = vld [vmem:[%s3 + $0x38] sm:$0xf]
    %v571 = vld [vmem:[%s3 + $0x3c] sm:$0xf]
    %v572 = vld [vmem:[%s3 + $0x40] sm:$0xf]
    %v573 = vld [vmem:[%s3 + $0x44] sm:$0xf]
    %v574 = vld [vmem:[%s3 + $0x48] sm:$0xf]
    %v575 = vld [vmem:[%s3 + $0x4c] sm:$0xf]
    %v576 = vld [vmem:[%s3 + $0x50] sm:$0xf]
    %v577 = vld [vmem:[%s3 + $0x54] sm:$0xf]
    %v578 = vld [vmem:[%s3 + $0x58] sm:$0xf]
    %v579 = vld [vmem:[%s3 + $0x5c] sm:$0xf]
    %v580 = vld [vmem:[%s3 + $0x60] sm:$0xf]
    %v581 = vld [vmem:[%s3 + $0x64] sm:$0xf]
    %v582 = vld [vmem:[%s3 + $0x68] sm:$0xf]
    %v583 = vld [vmem:[%s3 + $0x6c] sm:$0xf]
    %v584 = vld [vmem:[%s3 + $0x70] sm:$0xf]
    %v585 = vld [vmem:[%s3 + $0x74] sm:$0xf]
    %v586 = vld [vmem:[%s3 + $0x78] sm:$0xf]
    %v587 = vld [vmem:[%s3 + $0x7c] sm:$0xf]
    %v588 = vld [vmem:[%s4] sm:$0x1]
    %v590 = vlaneseq
    %v591 = vshrl.u32 %v590, 7
    %v592 = vsub.s32 0, %v591
    %v593 = vrot.slane %v588, %v592
    %v627 = vunpack.c.l.b16 %v556
    %v628 = vunpack.c.l.b16 %v557
    %v629 = vunpack.c.l.b16 %v558
    %v630 = vunpack.c.l.b16 %v559
    %v631 = vunpack.c.l.b16 %v560
    %v632 = vunpack.c.l.b16 %v561
    %v633 = vunpack.c.l.b16 %v562
    %v634 = vunpack.c.l.b16 %v563
    %v635 = vunpack.c.l.b16 %v564
    %v636 = vunpack.c.l.b16 %v565
    %v637 = vunpack.c.l.b16 %v566
    %v638 = vunpack.c.l.b16 %v567
    %v639 = vunpack.c.l.b16 %v568
    %v640 = vunpack.c.l.b16 %v569
    %v641 = vunpack.c.l.b16 %v570
    %v642 = vunpack.c.l.b16 %v571
    %v643 = vunpack.c.l.b16 %v572
    %v644 = vunpack.c.l.b16 %v573
    %v645 = vunpack.c.l.b16 %v574
    %v646 = vunpack.c.l.b16 %v575
    %v647 = vunpack.c.l.b16 %v576
    %v648 = vunpack.c.l.b16 %v577
    %v649 = vunpack.c.l.b16 %v578
    %v650 = vunpack.c.l.b16 %v579
    %v651 = vunpack.c.l.b16 %v580
    %v652 = vunpack.c.l.b16 %v581
    %v653 = vunpack.c.l.b16 %v582
    %v654 = vunpack.c.l.b16 %v583
    %v655 = vunpack.c.l.b16 %v584
    %v656 = vunpack.c.l.b16 %v585
    %v657 = vunpack.c.l.b16 %v586
    %v658 = vunpack.c.l.b16 %v587
    %v659 = vpack.c.b16 %v628, %v627
    %v660 = vpack.c.b16 %v630, %v629
    %v661 = vpack.c.b16 %v632, %v631
    %v662 = vpack.c.b16 %v634, %v633
    %v663 = vpack.c.b16 %v636, %v635
    %v664 = vpack.c.b16 %v638, %v637
    %v665 = vpack.c.b16 %v640, %v639
    %v666 = vpack.c.b16 %v642, %v641
    %v667 = vpack.c.b16 %v644, %v643
    %v668 = vpack.c.b16 %v646, %v645
    %v669 = vpack.c.b16 %v648, %v647
    %v670 = vpack.c.b16 %v650, %v649
    %v671 = vpack.c.b16 %v652, %v651
    %v672 = vpack.c.b16 %v654, %v653
    %v673 = vpack.c.b16 %v656, %v655
    %v674 = vpack.c.b16 %v658, %v657
    %691 = vmatprep.subr.bf16.mxu0 0
    %692 = vmatpush1.bf16.msra.mxu0 %v659
    %693 = vmatprep.subr.bf16.mxu0 0
    %694 = vmatpush1.bf16.msra.mxu0 %v660
    %695 = vmatprep.subr.bf16.mxu0 0
    %696 = vmatpush1.bf16.msra.mxu0 %v661
    %697 = vmatprep.subr.bf16.mxu0 0
    %698 = vmatpush1.bf16.msra.mxu0 %v662
    %699 = vmatprep.subr.bf16.mxu0 0
    %700 = vmatpush1.bf16.msra.mxu0 %v663
    %701 = vmatprep.subr.bf16.mxu0 0
    %702 = vmatpush1.bf16.msra.mxu0 %v664
    %703 = vmatprep.subr.bf16.mxu0 0
    %704 = vmatpush1.bf16.msra.mxu0 %v665
    %705 = vmatprep.subr.bf16.mxu0 0
    %706 = vmatpush1.bf16.msra.mxu0 %v666
    %707 = vmatprep.subr.bf16.mxu0 0
    %708 = vmatpush1.bf16.msra.mxu0 %v667
    %709 = vmatprep.subr.bf16.mxu0 0
    %710 = vmatpush1.bf16.msra.mxu0 %v668
    %711 = vmatprep.subr.bf16.mxu0 0
    %712 = vmatpush1.bf16.msra.mxu0 %v669
    %713 = vmatprep.subr.bf16.mxu0 0
    %714 = vmatpush1.bf16.msra.mxu0 %v670
    %715 = vmatprep.subr.bf16.mxu0 0
    %716 = vmatpush1.bf16.msra.mxu0 %v671
    %717 = vmatprep.subr.bf16.mxu0 0
    %718 = vmatpush1.bf16.msra.mxu0 %v672
    %719 = vmatprep.subr.bf16.mxu0 0
    %720 = vmatpush1.bf16.msra.mxu0 %v673
    %721 = vmatprep.subr.bf16.mxu0 0
    %722 = vmatpush1.bf16.msra.mxu0 %v674
    %723 = vmatprep.mubr.bf16.mxu0 %v555
    %724 = vmatmul.mubr.bf16.gmra.mrb[0].mxu0 %v554
    %v725 = vpop.f32.mrb[0].mxu0
    %v726 = vadd.f32 %v593, %v725
    %v727 = vpop.f32.mrb[0].mxu0
    %v728 = vpop.f32.mrb[0].mxu0
    %v729 = vpop.f32.mrb[0].mxu0
    %730 = vdwg.mxu0
    %vm731 = vcmask 15360
    %732 = vst.msk [vmem:[#allocation2] sm:$0xff] %vm731, %v726
    // Predicated region
    $region22: #{domain_classifier_forward.1} parent=1 // pred_check
      _
    $region23: #{domain_classifier_forward.1} parent=1 // pred_check_branch
      %734 = sbr.rel (0) target = $region25
    $region24: #{domain_classifier_forward.1} parent=1 // pred_region
      %s736 = ssub.s32 128, 32
      %737 = vsyncadd [#allocation3], %s736
      %s738 = sshll.u32 [#allocation2], 4
      %s739 = int_to_ptr.vmem [resolvable:$true] %s738
      %744 = dma.vmem_to_hbm [thread:$0]  %s739, 32, %s5, [#allocation3], 32, 32, 2
    $region25: #{domain_classifier_forward.1} parent=1 // pred_fallthru
      _
    // Predicated region
    $region26: #{domain_classifier_forward.1} parent=1 // pred_check
      _
    $region27: #{domain_classifier_forward.1} parent=1 // pred_check_branch
      %746 = sbr.rel (0) target = $region29
    $region28: #{domain_classifier_forward.1} parent=1 // pred_region
      %747 = dma.done [#allocation3], 128
    $region29: #{domain_classifier_forward.1} parent=1 // pred_fallthru
      _
    %748 = vsyncpa [#allocation3], 1

</llo_original>
